<compile_context>
chip_gen: v7x
topology: tpu7x:2x2x1
jax: 0.10.0
libtpu: 0.0.40
codegen_flags: <defaults>
</compile_context>

<pallas_src>
import math
import jax
import jax.numpy as jnp
from jax.experimental import pallas as pl
from jax.experimental.pallas import tpu as pltpu


def _round_up(x, m):
    return ((x + m - 1) // m) * m


def api_input_layer_kernel(ally_ref, enemy_ref, ts_ref,
                           w1a_ref, b1a_ref, w2a_ref,
                           w1e_ref, b1e_ref, w2e_ref,
                           wt_ref, bias_ref, out_ref):
    tb, d = out_ref.shape
    n_agents = ally_ref.shape[0] // tb
    n_enemies = enemy_ref.shape[0] // tb

    # ---- first layer: ONE batched matmul per entity type (agent axis folded into rows) ----
    ha = jnp.maximum(
        jnp.dot(ally_ref[...], w1a_ref[...], preferred_element_type=jnp.float32)
        + b1a_ref[...],
        0.0,
    )  # (n_agents * tb, H)
    he = jnp.maximum(
        jnp.dot(enemy_ref[...], w1e_ref[...], preferred_element_type=jnp.float32)
        + b1e_ref[...],
        0.0,
    )  # (n_enemies * tb, H)

    # ---- reduce hidden activations over agents/enemies BEFORE the 2nd (linear) layer ----
    # static, tile-aligned sublane slices (tb is a multiple of 8) -> cheap VPU adds.
    ha_sum = ha[0:tb, :]
    for a in range(1, n_agents):
        ha_sum = ha_sum + ha[a * tb:(a + 1) * tb, :]
    he_sum = he[0:tb, :]
    for e in range(1, n_enemies):
        he_sum = he_sum + he[e * tb:(e + 1) * tb, :]

    # ---- constants folded into the accumulator: bias + timestep embedding ----
    # timestep Linear(1, D, bias=False) == (TB,1) * (1,D) broadcast multiply.
    acc = bias_ref[...] + ts_ref[...] * wt_ref[...]  # (tb, d)

    # ---- second layer: ONE matmul per entity type (linearity of W2) ----
    acc = acc + jnp.dot(ha_sum, w2a_ref[...], preferred_element_type=jnp.float32)
    acc = acc + jnp.dot(he_sum, w2e_ref[...], preferred_element_type=jnp.float32)

    out_ref[...] = acc


def api_input_layer(ally_flat, enemy_flat, timestep, params, n_agents, n_enemies,
                    *, tile_b=None):
    """ally_flat: (B*n_agents, F_a)  (row = b*n_agents + a, PyTorch layout)
       enemy_flat: (B*n_enemies, F_e)
       timestep: (B, 1)
       All weights stored as (in_features, out_features) (i.e. PyTorch W.T)."""
    B = timestep.shape[0]
    f_a = ally_flat.shape[-1]
    f_e = enemy_flat.shape[-1]
    d = params["bias"].shape[-1]
    h = params["w1a"].shape[-1]

    if tile_b is None:
        tile_b = min(512, _round_up(B, 8))
    tile_b = _round_up(tile_b, 8)
    bp = _round_up(B, tile_b)
    nblk = bp // tile_b

    def relayout(flat, n_per, f):
        # (B*n_per, f) batch-major -> per batch-tile agent-major rows, so the kernel
        # can do one matmul on the whole (n_per*tile_b, f) slab and reduce over
        # static, contiguous sublane slices (no in-kernel reshape).
        x = flat.reshape(B, n_per, f)
        if bp != B:
            x = jnp.pad(x, ((0, bp - B), (0, 0), (0, 0)))
        x = x.reshape(nblk, tile_b, n_per, f).transpose(0, 2, 1, 3)
        return x.reshape(nblk * n_per * tile_b, f)

    ally = relayout(ally_flat, n_agents, f_a)
    enemy = relayout(enemy_flat, n_enemies, f_e)
    ts = timestep if bp == B else jnp.pad(timestep, ((0, bp - B), (0, 0)))

    const = lambda i: (0, 0)
    out = pl.pallas_call(
        api_input_layer_kernel,
        out_shape=jax.ShapeDtypeStruct((bp, d), jnp.float32),
        grid=(nblk,),
        in_specs=[
            pl.BlockSpec((n_agents * tile_b, f_a), lambda i: (i, 0)),
            pl.BlockSpec((n_enemies * tile_b, f_e), lambda i: (i, 0)),
            pl.BlockSpec((tile_b, 1), lambda i: (i, 0)),
            pl.BlockSpec((f_a, h), const),   # w1a
            pl.BlockSpec((1, h), const),     # b1a
            pl.BlockSpec((h, d), const),     # w2a
            pl.BlockSpec((f_e, h), const),   # w1e
            pl.BlockSpec((1, h), const),     # b1e
            pl.BlockSpec((h, d), const),     # w2e
            pl.BlockSpec((1, d), const),     # wt
            pl.BlockSpec((1, d), const),     # bias
        ],
        out_specs=pl.BlockSpec((tile_b, d), lambda i: (i, 0)),
        compiler_params=pltpu.CompilerParams(
            dimension_semantics=("parallel",)),
    )(ally, enemy, ts,
      params["w1a"], params["b1a"], params["w2a"],
      params["w1e"], params["b1e"], params["w2e"],
      params["wt"], params["bias"])
    return out[:B]


def init_params(key, f_ally, f_enemy, hyper_dim, out_dim, n_agents, n_enemies):
    """Deterministic init mimicking nn.Linear defaults (uniform +-1/sqrt(fan_in))."""
    ks = jax.random.split(key, 8)

    def lin(k, fan_in, shape):
        bound = 1.0 / math.sqrt(fan_in)
        return jax.random.uniform(k, shape, jnp.float32, -bound, bound)

    fan_in_bias = f_enemy * n_enemies + f_ally * n_agents
    return {
        "w1a": lin(ks[0], f_ally, (f_ally, hyper_dim)),
        "b1a": lin(ks[1], f_ally, (1, hyper_dim)),
        "w2a": lin(ks[2], hyper_dim, (hyper_dim, out_dim)),
        "w1e": lin(ks[3], f_enemy, (f_enemy, hyper_dim)),
        "b1e": lin(ks[4], f_enemy, (1, hyper_dim)),
        "w2e": lin(ks[5], hyper_dim, (hyper_dim, out_dim)),
        "wt":  lin(ks[6], 1, (1, out_dim)),
        "bias": lin(ks[7], fan_in_bias, (1, out_dim)),
    }


def reference_forward(ally_flat, enemy_flat, timestep, params, n_agents, n_enemies, out_dim):
    """Pure-JAX mirror of the PyTorch forward (for correctness checking)."""
    ha = jax.nn.relu(ally_flat @ params["w1a"] + params["b1a"])
    ally_emb = (ha @ params["w2a"]).reshape(-1, n_agents, out_dim).sum(axis=1)
    he = jax.nn.relu(enemy_flat @ params["w1e"] + params["b1e"])
    enemy_emb = (he @ params["w2e"]).reshape(-1, n_enemies, out_dim).sum(axis=1)
    ts_emb = timestep @ params["wt"]
    return ally_emb + enemy_emb + params["bias"] + ts_emb


if __name__ == "__main__":
    # Small, module-consistent shapes (B deliberately not a multiple of tile_b to
    # exercise the padding path; grid has 3 batch tiles).
    B = 40                # batch (of states)
    n_agents = 3
    n_enemies = 4
    f_ally = 7            # args.state_ally_feats_size
    f_enemy = 6           # args.state_enemy_feats_size
    hyper_dim = 16        # args.api_hyper_dim
    out_dim = 32          # output_dim

    key = jax.random.PRNGKey(0)
    k_par, k_a, k_e, k_t = jax.random.split(key, 4)

    params = init_params(k_par, f_ally, f_enemy, hyper_dim, out_dim, n_agents, n_enemies)

    # state_components as the PyTorch module sees them (batch-major flat rows):
    ally_flat = jax.random.normal(k_a, (B * n_agents, f_ally), jnp.float32)
    enemy_flat = jax.random.normal(k_e, (B * n_enemies, f_enemy), jnp.float32)
    timestep = jax.random.uniform(k_t, (B, 1), jnp.float32)

    out = api_input_layer(ally_flat, enemy_flat, timestep, params,
                          n_agents, n_enemies, tile_b=16)
    out = jax.block_until_ready(out)

    ref = reference_forward(ally_flat, enemy_flat, timestep, params,
                            n_agents, n_enemies, out_dim)
    assert out.shape == (B, out_dim)
    assert jnp.allclose(out, ref, atol=1e-5, rtol=1e-5), "mismatch vs pure-JAX reference"

    print("KERNEL_OK")
</pallas_src>

<mosaic_0001>
module attributes {stable_mosaic.version = 11 : i64} {
  func.func @api_input_layer_kernel(%arg0: i32, %arg1: memref<48x7xf32, #tpu.memory_space<vmem>>, %arg2: memref<64x6xf32, #tpu.memory_space<vmem>>, %arg3: memref<16x1xf32, #tpu.memory_space<vmem>>, %arg4: memref<7x16xf32, #tpu.memory_space<vmem>>, %arg5: memref<1x16xf32, #tpu.memory_space<vmem>>, %arg6: memref<16x32xf32, #tpu.memory_space<vmem>>, %arg7: memref<6x16xf32, #tpu.memory_space<vmem>>, %arg8: memref<1x16xf32, #tpu.memory_space<vmem>>, %arg9: memref<16x32xf32, #tpu.memory_space<vmem>>, %arg10: memref<1x32xf32, #tpu.memory_space<vmem>>, %arg11: memref<1x32xf32, #tpu.memory_space<vmem>>, %arg12: memref<16x32xf32, #tpu.memory_space<vmem>>) attributes {dimension_semantics = [#tpu.dimension_semantics<parallel>], iteration_bounds = array<i64: 3>, scalar_prefetch = 0 : i64, scratch_operands = 0 : i64, tpu.core_type = #tpu.core_type<tc>, window_params = [{transform_indices = @transform_0, window_bounds = array<i64: 48, 7>}, {transform_indices = @transform_1, window_bounds = array<i64: 64, 6>}, {transform_indices = @transform_2, window_bounds = array<i64: 16, 1>}, {pipeline_mode = #tpu.pipeline_mode<synchronous>, transform_indices = @transform_3, window_bounds = array<i64: 7, 16>}, {pipeline_mode = #tpu.pipeline_mode<synchronous>, transform_indices = @transform_4, window_bounds = array<i64: 1, 16>}, {pipeline_mode = #tpu.pipeline_mode<synchronous>, transform_indices = @transform_5, window_bounds = array<i64: 16, 32>}, {pipeline_mode = #tpu.pipeline_mode<synchronous>, transform_indices = @transform_6, window_bounds = array<i64: 6, 16>}, {pipeline_mode = #tpu.pipeline_mode<synchronous>, transform_indices = @transform_7, window_bounds = array<i64: 1, 16>}, {pipeline_mode = #tpu.pipeline_mode<synchronous>, transform_indices = @transform_8, window_bounds = array<i64: 16, 32>}, {pipeline_mode = #tpu.pipeline_mode<synchronous>, transform_indices = @transform_9, window_bounds = array<i64: 1, 32>}, {pipeline_mode = #tpu.pipeline_mode<synchronous>, transform_indices = @transform_10, window_bounds = array<i64: 1, 32>}, {transform_indices = @transform_11, window_bounds = array<i64: 16, 32>}]} {
    %c0 = arith.constant 0 : index
    %c0_0 = arith.constant 0 : index
    %0 = vector.load %arg1[%c0, %c0_0] : memref<48x7xf32, #tpu.memory_space<vmem>>, vector<48x7xf32>
    %c0_1 = arith.constant 0 : index
    %c0_2 = arith.constant 0 : index
    %1 = vector.load %arg4[%c0_1, %c0_2] : memref<7x16xf32, #tpu.memory_space<vmem>>, vector<7x16xf32>
    %cst = arith.constant dense<0.000000e+00> : vector<48x16xf32>
    %2 = tpu.matmul %0, %1, %cst {dimension_numbers = #tpu.dot_dimension_numbers<[1], [0], [0], [1], [0, 0, 1, 1], [], []>} : vector<48x7xf32>, vector<7x16xf32>, vector<48x16xf32> -> vector<48x16xf32>
    %c0_3 = arith.constant 0 : index
    %c0_4 = arith.constant 0 : index
    %3 = vector.load %arg5[%c0_3, %c0_4] : memref<1x16xf32, #tpu.memory_space<vmem>>, vector<1x16xf32>
    %4 = vector.broadcast %3 : vector<1x16xf32> to vector<48x16xf32>
    %5 = arith.addf %2, %4 : vector<48x16xf32>
    %cst_5 = arith.constant 0.000000e+00 : f32
    %6 = vector.broadcast %cst_5 : f32 to vector<48x16xf32>
    %7 = arith.maximumf %5, %6 : vector<48x16xf32>
    %c0_6 = arith.constant 0 : index
    %c0_7 = arith.constant 0 : index
    %8 = vector.load %arg2[%c0_6, %c0_7] : memref<64x6xf32, #tpu.memory_space<vmem>>, vector<64x6xf32>
    %c0_8 = arith.constant 0 : index
    %c0_9 = arith.constant 0 : index
    %9 = vector.load %arg7[%c0_8, %c0_9] : memref<6x16xf32, #tpu.memory_space<vmem>>, vector<6x16xf32>
    %cst_10 = arith.constant dense<0.000000e+00> : vector<64x16xf32>
    %10 = tpu.matmul %8, %9, %cst_10 {dimension_numbers = #tpu.dot_dimension_numbers<[1], [0], [0], [1], [0, 0, 1, 1], [], []>} : vector<64x6xf32>, vector<6x16xf32>, vector<64x16xf32> -> vector<64x16xf32>
    %c0_11 = arith.constant 0 : index
    %c0_12 = arith.constant 0 : index
    %11 = vector.load %arg8[%c0_11, %c0_12] : memref<1x16xf32, #tpu.memory_space<vmem>>, vector<1x16xf32>
    %12 = vector.broadcast %11 : vector<1x16xf32> to vector<64x16xf32>
    %13 = arith.addf %10, %12 : vector<64x16xf32>
    %cst_13 = arith.constant 0.000000e+00 : f32
    %14 = vector.broadcast %cst_13 : f32 to vector<64x16xf32>
    %15 = arith.maximumf %13, %14 : vector<64x16xf32>
    %16 = vector.extract_strided_slice %7 {offsets = [0, 0], sizes = [16, 16], strides = [1, 1]} : vector<48x16xf32> to vector<16x16xf32>
    %17 = vector.extract_strided_slice %7 {offsets = [16, 0], sizes = [16, 16], strides = [1, 1]} : vector<48x16xf32> to vector<16x16xf32>
    %18 = arith.addf %16, %17 : vector<16x16xf32>
    %19 = vector.extract_strided_slice %7 {offsets = [32, 0], sizes = [16, 16], strides = [1, 1]} : vector<48x16xf32> to vector<16x16xf32>
    %20 = arith.addf %18, %19 : vector<16x16xf32>
    %21 = vector.extract_strided_slice %15 {offsets = [0, 0], sizes = [16, 16], strides = [1, 1]} : vector<64x16xf32> to vector<16x16xf32>
    %22 = vector.extract_strided_slice %15 {offsets = [16, 0], sizes = [16, 16], strides = [1, 1]} : vector<64x16xf32> to vector<16x16xf32>
    %23 = arith.addf %21, %22 : vector<16x16xf32>
    %24 = vector.extract_strided_slice %15 {offsets = [32, 0], sizes = [16, 16], strides = [1, 1]} : vector<64x16xf32> to vector<16x16xf32>
    %25 = arith.addf %23, %24 : vector<16x16xf32>
    %26 = vector.extract_strided_slice %15 {offsets = [48, 0], sizes = [16, 16], strides = [1, 1]} : vector<64x16xf32> to vector<16x16xf32>
    %27 = arith.addf %25, %26 : vector<16x16xf32>
    %c0_14 = arith.constant 0 : index
    %c0_15 = arith.constant 0 : index
    %28 = vector.load %arg11[%c0_14, %c0_15] : memref<1x32xf32, #tpu.memory_space<vmem>>, vector<1x32xf32>
    %c0_16 = arith.constant 0 : index
    %c0_17 = arith.constant 0 : index
    %29 = vector.load %arg3[%c0_16, %c0_17] : memref<16x1xf32, #tpu.memory_space<vmem>>, vector<16x1xf32>
    %c0_18 = arith.constant 0 : index
    %c0_19 = arith.constant 0 : index
    %30 = vector.load %arg10[%c0_18, %c0_19] : memref<1x32xf32, #tpu.memory_space<vmem>>, vector<1x32xf32>
    %31 = vector.broadcast %29 : vector<16x1xf32> to vector<16x32xf32>
    %32 = vector.broadcast %30 : vector<1x32xf32> to vector<16x32xf32>
    %33 = arith.mulf %31, %32 : vector<16x32xf32>
    %34 = vector.broadcast %28 : vector<1x32xf32> to vector<16x32xf32>
    %35 = arith.addf %34, %33 : vector<16x32xf32>
    %c0_20 = arith.constant 0 : index
    %c0_21 = arith.constant 0 : index
    %36 = vector.load %arg6[%c0_20, %c0_21] : memref<16x32xf32, #tpu.memory_space<vmem>>, vector<16x32xf32>
    %cst_22 = arith.constant dense<0.000000e+00> : vector<16x32xf32>
    %37 = tpu.matmul %20, %36, %cst_22 {dimension_numbers = #tpu.dot_dimension_numbers<[1], [0], [0], [1], [0, 0, 1, 1], [], []>} : vector<16x16xf32>, vector<16x32xf32>, vector<16x32xf32> -> vector<16x32xf32>
    %38 = arith.addf %35, %37 : vector<16x32xf32>
    %c0_23 = arith.constant 0 : index
    %c0_24 = arith.constant 0 : index
    %39 = vector.load %arg9[%c0_23, %c0_24] : memref<16x32xf32, #tpu.memory_space<vmem>>, vector<16x32xf32>
    %cst_25 = arith.constant dense<0.000000e+00> : vector<16x32xf32>
    %40 = tpu.matmul %27, %39, %cst_25 {dimension_numbers = #tpu.dot_dimension_numbers<[1], [0], [0], [1], [0, 0, 1, 1], [], []>} : vector<16x16xf32>, vector<16x32xf32>, vector<16x32xf32> -> vector<16x32xf32>
    %41 = arith.addf %38, %40 : vector<16x32xf32>
    %c0_26 = arith.constant 0 : index
    %c0_27 = arith.constant 0 : index
    %42 = vector.load %arg12[%c0_26, %c0_27] : memref<16x32xf32, #tpu.memory_space<vmem>>, vector<16x32xf32>
    tpu.vector_store %arg12[%c0_26, %c0_27], %41 {strides = array<i32>} : memref<16x32xf32, #tpu.memory_space<vmem>>, vector<16x32xf32>,
    return
  }
  func.func @transform_0(%arg0: i32) -> (i32, i32) {
    %c0_i32 = arith.constant 0 : i32
    %c0_i32_0 = arith.constant 0 : i32
    return %arg0, %c0_i32 : i32, i32
  }
  func.func @transform_1(%arg0: i32) -> (i32, i32) {
    %c0_i32 = arith.constant 0 : i32
    %c0_i32_0 = arith.constant 0 : i32
    return %arg0, %c0_i32 : i32, i32
  }
  func.func @transform_2(%arg0: i32) -> (i32, i32) {
    %c0_i32 = arith.constant 0 : i32
    %c0_i32_0 = arith.constant 0 : i32
    return %arg0, %c0_i32 : i32, i32
  }
  func.func @transform_3(%arg0: i32) -> (i32, i32) {
    %c0_i32 = arith.constant 0 : i32
    %c0_i32_0 = arith.constant 0 : i32
    %c0_i32_1 = arith.constant 0 : i32
    return %c0_i32, %c0_i32_0 : i32, i32
  }
  func.func @transform_4(%arg0: i32) -> (i32, i32) {
    %c0_i32 = arith.constant 0 : i32
    %c0_i32_0 = arith.constant 0 : i32
    %c0_i32_1 = arith.constant 0 : i32
    return %c0_i32, %c0_i32_0 : i32, i32
  }
  func.func @transform_5(%arg0: i32) -> (i32, i32) {
    %c0_i32 = arith.constant 0 : i32
    %c0_i32_0 = arith.constant 0 : i32
    %c0_i32_1 = arith.constant 0 : i32
    return %c0_i32, %c0_i32_0 : i32, i32
  }
  func.func @transform_6(%arg0: i32) -> (i32, i32) {
    %c0_i32 = arith.constant 0 : i32
    %c0_i32_0 = arith.constant 0 : i32
    %c0_i32_1 = arith.constant 0 : i32
    return %c0_i32, %c0_i32_0 : i32, i32
  }
  func.func @transform_7(%arg0: i32) -> (i32, i32) {
    %c0_i32 = arith.constant 0 : i32
    %c0_i32_0 = arith.constant 0 : i32
    %c0_i32_1 = arith.constant 0 : i32
    return %c0_i32, %c0_i32_0 : i32, i32
  }
  func.func @transform_8(%arg0: i32) -> (i32, i32) {
    %c0_i32 = arith.constant 0 : i32
    %c0_i32_0 = arith.constant 0 : i32
    %c0_i32_1 = arith.constant 0 : i32
    return %c0_i32, %c0_i32_0 : i32, i32
  }
  func.func @transform_9(%arg0: i32) -> (i32, i32) {
    %c0_i32 = arith.constant 0 : i32
    %c0_i32_0 = arith.constant 0 : i32
    %c0_i32_1 = arith.constant 0 : i32
    return %c0_i32, %c0_i32_0 : i32, i32
  }
  func.func @transform_10(%arg0: i32) -> (i32, i32) {
    %c0_i32 = arith.constant 0 : i32
    %c0_i32_0 = arith.constant 0 : i32
    %c0_i32_1 = arith.constant 0 : i32
    return %c0_i32, %c0_i32_0 : i32, i32
  }
  func.func @transform_11(%arg0: i32) -> (i32, i32) {
    %c0_i32 = arith.constant 0 : i32
    %c0_i32_0 = arith.constant 0 : i32
    return %arg0, %c0_i32 : i32, i32
  }
}

</mosaic_0001>

<llo_original>
// kernel: tpu_custom_call.1
$region0: #{tpu_custom_call.1}
  #allocation0 [shape = 'u32[]', space=smem, size = 0x4, offset = 0x4, fixed_abs, tag = 'smem constant byte address 0x4 - core index']
  #allocation1 [shape = 'u32[144,128]{1,0:T(1,128)}', space=vmem, size = 0x12000, scoped, tag = 'internal scratch']
  %s0 = inlined_call_operand.vmem [shape: f32[144,7], index: 0, kind: input, shape index: {}]
  %s1 = inlined_call_operand.vmem [shape: f32[192,6], index: 1, kind: input, shape index: {}]
  %s2 = inlined_call_operand.vmem [shape: f32[48,1], index: 2, kind: input, shape index: {}]
  %s3 = inlined_call_operand.vmem [shape: f32[7,16], index: 3, kind: input, shape index: {}]
  %s4 = inlined_call_operand.vmem [shape: f32[1,16], index: 4, kind: input, shape index: {}]
  %s5 = inlined_call_operand.vmem [shape: f32[16,32], index: 5, kind: input, shape index: {}]
  %s6 = inlined_call_operand.vmem [shape: f32[6,16], index: 6, kind: input, shape index: {}]
  %s7 = inlined_call_operand.vmem [shape: f32[1,16], index: 7, kind: input, shape index: {}]
  %s8 = inlined_call_operand.vmem [shape: f32[16,32], index: 8, kind: input, shape index: {}]
  %s9 = inlined_call_operand.vmem [shape: f32[1,32], index: 9, kind: input, shape index: {}]
  %s10 = inlined_call_operand.vmem [shape: f32[1,32], index: 10, kind: input, shape index: {}]
  %s11 = inlined_call_operand.vmem [shape: f32[48,32], index: 11, kind: output, shape index: {}]
  %s12 = sld [smem:[#allocation0]]
  $region77: #{tpu_custom_call.1} parent=0
    _
  %s14 = ssub.s32 1, %s12
  %s15 = scalar_select 0, %s14, %s12
  loop: start=0, step=1, limit=5
  $region2: #{tpu_custom_call.1} parent=0 // loop_pre_header
    _
  $region3: #{tpu_custom_call.1} parent=0 // loop_header
    %s17 = sphi 0, %s21
    %p18 = scmp.ge.s32.totalorder %s17, 5
    %s27 = sphi 0, %s29
    %s30 = sphi 0, %s27
    %s31 = sphi 0, %s30
    %s47 = sphi 0, %s31
    %s53 = sphi 0, %s55
    %s56 = sphi 0, %s53
    %s57 = sphi 0, %s56
    %s73 = sphi 0, %s57
    %s79 = sphi 0, %s81
    %s82 = sphi 0, %s79
    %s83 = sphi 0, %s82
    %s99 = sphi 0, %s83
    %s103 = sphi 0, %s103
    %s105 = sphi 0, %s103
    %s106 = sphi 0, %s105
    %s120 = sphi 0, %s106
    %s124 = sphi 0, %s124
    %s126 = sphi 0, %s124
    %s127 = sphi 0, %s126
    %s141 = sphi 0, %s127
    %s145 = sphi 0, %s145
    %s147 = sphi 0, %s145
    %s148 = sphi 0, %s147
    %s162 = sphi 0, %s148
    %s166 = sphi 0, %s166
    %s168 = sphi 0, %s166
    %s169 = sphi 0, %s168
    %s183 = sphi 0, %s169
    %s187 = sphi 0, %s187
    %s189 = sphi 0, %s187
    %s190 = sphi 0, %s189
    %s204 = sphi 0, %s190
    %s208 = sphi 0, %s208
    %s210 = sphi 0, %s208
    %s211 = sphi 0, %s210
    %s225 = sphi 0, %s211
    %s229 = sphi 0, %s229
    %s231 = sphi 0, %s229
    %s232 = sphi 0, %s231
    %s246 = sphi 0, %s232
    %s250 = sphi 0, %s250
    %s252 = sphi 0, %s250
    %s253 = sphi 0, %s252
    %s267 = sphi 0, %s253
    %s273 = sphi 0, %s275
    %s276 = sphi 0, %s273
    %s277 = sphi 0, %s276
    %s293 = sphi 0, %s277
  $region4: #{tpu_custom_call.1} parent=0 // loop_header_branch
    %20 = sbr.rel (%p18) target = $region8
  $region5: #{tpu_custom_call.1} parent=0 // loop_body
    %s22 = ssub.s32 %s17, 1
    %s23 = ssub.s32 %s17, 2
    %s24 = sadd.s32 %s17, 1
    %s25 = ssub.s32 %s17, %s24
    %p26 = scmp.eq.s32.totalorder %s25, 0
    %s28 = sadd.s32 %s27, 1
    %s29 = scalar_select %p26, %s27, %s28
    %p32 = pneg %p26
    %p33 = scmp.eq.s32.totalorder %s17, 2
    %p34 = por %p32, %p33
    %p35 = scmp.ne.s32.totalorder %s27, %s30
    %p36 = scmp.eq.s32.totalorder %s17, 0
    %p37 = por %p35, %p36
    %p38 = scmp.ne.s32.totalorder %s27, %s30
    %p39 = scmp.eq.s32.totalorder %s22, 2
    %p40 = por %p38, %p39
    %p41 = scmp.ne.s32.totalorder %s30, %s31
    %p42 = scmp.eq.s32.totalorder %s22, 0
    %p43 = por %p41, %p42
    %p44 = scmp.ne.s32.totalorder %s30, %s31
    %p45 = scmp.eq.s32.totalorder %s23, 2
    %p46 = por %p44, %p45
    %p48 = scmp.ne.s32.totalorder %s31, %s47
    %p49 = scmp.eq.s32.totalorder %s23, 0
    %p50 = por %p48, %p49
    %s51 = ssub.s32 %s17, %s24
    %p52 = scmp.eq.s32.totalorder %s51, 0
    %s54 = sadd.s32 %s53, 1
    %s55 = scalar_select %p52, %s53, %s54
    %p58 = pneg %p52
    %p59 = scmp.eq.s32.totalorder %s17, 2
    %p60 = por %p58, %p59
    %p61 = scmp.ne.s32.totalorder %s53, %s56
    %p62 = scmp.eq.s32.totalorder %s17, 0
    %p63 = por %p61, %p62
    %p64 = scmp.ne.s32.totalorder %s53, %s56
    %p65 = scmp.eq.s32.totalorder %s22, 2
    %p66 = por %p64, %p65
    %p67 = scmp.ne.s32.totalorder %s56, %s57
    %p68 = scmp.eq.s32.totalorder %s22, 0
    %p69 = por %p67, %p68
    %p70 = scmp.ne.s32.totalorder %s56, %s57
    %p71 = scmp.eq.s32.totalorder %s23, 2
    %p72 = por %p70, %p71
    %p74 = scmp.ne.s32.totalorder %s57, %s73
    %p75 = scmp.eq.s32.totalorder %s23, 0
    %p76 = por %p74, %p75
    %s77 = ssub.s32 %s17, %s24
    %p78 = scmp.eq.s32.totalorder %s77, 0
    %s80 = sadd.s32 %s79, 1
    %s81 = scalar_select %p78, %s79, %s80
    %p84 = pneg %p78
    %p85 = scmp.eq.s32.totalorder %s17, 2
    %p86 = por %p84, %p85
    %p87 = scmp.ne.s32.totalorder %s79, %s82
    %p88 = scmp.eq.s32.totalorder %s17, 0
    %p89 = por %p87, %p88
    %p90 = scmp.ne.s32.totalorder %s79, %s82
    %p91 = scmp.eq.s32.totalorder %s22, 2
    %p92 = por %p90, %p91
    %p93 = scmp.ne.s32.totalorder %s82, %s83
    %p94 = scmp.eq.s32.totalorder %s22, 0
    %p95 = por %p93, %p94
    %p96 = scmp.ne.s32.totalorder %s82, %s83
    %p97 = scmp.eq.s32.totalorder %s23, 2
    %p98 = por %p96, %p97
    %p100 = scmp.ne.s32.totalorder %s83, %s99
    %p101 = scmp.eq.s32.totalorder %s23, 0
    %p102 = por %p100, %p101
    %s104 = sadd.s32 %s103, 1
    %p107 = scmp.eq.s32.totalorder %s17, 2
    %p108 = scmp.ne.s32.totalorder %s103, %s105
    %p109 = scmp.eq.s32.totalorder %s17, 0
    %p110 = por %p108, %p109
    %p111 = scmp.ne.s32.totalorder %s103, %s105
    %p112 = scmp.eq.s32.totalorder %s22, 2
    %p113 = por %p111, %p112
    %p114 = scmp.ne.s32.totalorder %s105, %s106
    %p115 = scmp.eq.s32.totalorder %s22, 0
    %p116 = por %p114, %p115
    %p117 = scmp.ne.s32.totalorder %s105, %s106
    %p118 = scmp.eq.s32.totalorder %s23, 2
    %p119 = por %p117, %p118
    %p121 = scmp.ne.s32.totalorder %s106, %s120
    %p122 = scmp.eq.s32.totalorder %s23, 0
    %p123 = por %p121, %p122
    %s125 = sadd.s32 %s124, 1
    %p128 = scmp.eq.s32.totalorder %s17, 2
    %p129 = scmp.ne.s32.totalorder %s124, %s126
    %p130 = scmp.eq.s32.totalorder %s17, 0
    %p131 = por %p129, %p130
    %p132 = scmp.ne.s32.totalorder %s124, %s126
    %p133 = scmp.eq.s32.totalorder %s22, 2
    %p134 = por %p132, %p133
    %p135 = scmp.ne.s32.totalorder %s126, %s127
    %p136 = scmp.eq.s32.totalorder %s22, 0
    %p137 = por %p135, %p136
    %p138 = scmp.ne.s32.totalorder %s126, %s127
    %p139 = scmp.eq.s32.totalorder %s23, 2
    %p140 = por %p138, %p139
    %p142 = scmp.ne.s32.totalorder %s127, %s141
    %p143 = scmp.eq.s32.totalorder %s23, 0
    %p144 = por %p142, %p143
    %s146 = sadd.s32 %s145, 1
    %p149 = scmp.eq.s32.totalorder %s17, 2
    %p150 = scmp.ne.s32.totalorder %s145, %s147
    %p151 = scmp.eq.s32.totalorder %s17, 0
    %p152 = por %p150, %p151
    %p153 = scmp.ne.s32.totalorder %s145, %s147
    %p154 = scmp.eq.s32.totalorder %s22, 2
    %p155 = por %p153, %p154
    %p156 = scmp.ne.s32.totalorder %s147, %s148
    %p157 = scmp.eq.s32.totalorder %s22, 0
    %p158 = por %p156, %p157
    %p159 = scmp.ne.s32.totalorder %s147, %s148
    %p160 = scmp.eq.s32.totalorder %s23, 2
    %p161 = por %p159, %p160
    %p163 = scmp.ne.s32.totalorder %s148, %s162
    %p164 = scmp.eq.s32.totalorder %s23, 0
    %p165 = por %p163, %p164
    %s167 = sadd.s32 %s166, 1
    %p170 = scmp.eq.s32.totalorder %s17, 2
    %p171 = scmp.ne.s32.totalorder %s166, %s168
    %p172 = scmp.eq.s32.totalorder %s17, 0
    %p173 = por %p171, %p172
    %p174 = scmp.ne.s32.totalorder %s166, %s168
    %p175 = scmp.eq.s32.totalorder %s22, 2
    %p176 = por %p174, %p175
    %p177 = scmp.ne.s32.totalorder %s168, %s169
    %p178 = scmp.eq.s32.totalorder %s22, 0
    %p179 = por %p177, %p178
    %p180 = scmp.ne.s32.totalorder %s168, %s169
    %p181 = scmp.eq.s32.totalorder %s23, 2
    %p182 = por %p180, %p181
    %p184 = scmp.ne.s32.totalorder %s169, %s183
    %p185 = scmp.eq.s32.totalorder %s23, 0
    %p186 = por %p184, %p185
    %s188 = sadd.s32 %s187, 1
    %p191 = scmp.eq.s32.totalorder %s17, 2
    %p192 = scmp.ne.s32.totalorder %s187, %s189
    %p193 = scmp.eq.s32.totalorder %s17, 0
    %p194 = por %p192, %p193
    %p195 = scmp.ne.s32.totalorder %s187, %s189
    %p196 = scmp.eq.s32.totalorder %s22, 2
    %p197 = por %p195, %p196
    %p198 = scmp.ne.s32.totalorder %s189, %s190
    %p199 = scmp.eq.s32.totalorder %s22, 0
    %p200 = por %p198, %p199
    %p201 = scmp.ne.s32.totalorder %s189, %s190
    %p202 = scmp.eq.s32.totalorder %s23, 2
    %p203 = por %p201, %p202
    %p205 = scmp.ne.s32.totalorder %s190, %s204
    %p206 = scmp.eq.s32.totalorder %s23, 0
    %p207 = por %p205, %p206
    %s209 = sadd.s32 %s208, 1
    %p212 = scmp.eq.s32.totalorder %s17, 2
    %p213 = scmp.ne.s32.totalorder %s208, %s210
    %p214 = scmp.eq.s32.totalorder %s17, 0
    %p215 = por %p213, %p214
    %p216 = scmp.ne.s32.totalorder %s208, %s210
    %p217 = scmp.eq.s32.totalorder %s22, 2
    %p218 = por %p216, %p217
    %p219 = scmp.ne.s32.totalorder %s210, %s211
    %p220 = scmp.eq.s32.totalorder %s22, 0
    %p221 = por %p219, %p220
    %p222 = scmp.ne.s32.totalorder %s210, %s211
    %p223 = scmp.eq.s32.totalorder %s23, 2
    %p224 = por %p222, %p223
    %p226 = scmp.ne.s32.totalorder %s211, %s225
    %p227 = scmp.eq.s32.totalorder %s23, 0
    %p228 = por %p226, %p227
    %s230 = sadd.s32 %s229, 1
    %p233 = scmp.eq.s32.totalorder %s17, 2
    %p234 = scmp.ne.s32.totalorder %s229, %s231
    %p235 = scmp.eq.s32.totalorder %s17, 0
    %p236 = por %p234, %p235
    %p237 = scmp.ne.s32.totalorder %s229, %s231
    %p238 = scmp.eq.s32.totalorder %s22, 2
    %p239 = por %p237, %p238
    %p240 = scmp.ne.s32.totalorder %s231, %s232
    %p241 = scmp.eq.s32.totalorder %s22, 0
    %p242 = por %p240, %p241
    %p243 = scmp.ne.s32.totalorder %s231, %s232
    %p244 = scmp.eq.s32.totalorder %s23, 2
    %p245 = por %p243, %p244
    %p247 = scmp.ne.s32.totalorder %s232, %s246
    %p248 = scmp.eq.s32.totalorder %s23, 0
    %p249 = por %p247, %p248
    %s251 = sadd.s32 %s250, 1
    %p254 = scmp.eq.s32.totalorder %s17, 2
    %p255 = scmp.ne.s32.totalorder %s250, %s252
    %p256 = scmp.eq.s32.totalorder %s17, 0
    %p257 = por %p255, %p256
    %p258 = scmp.ne.s32.totalorder %s250, %s252
    %p259 = scmp.eq.s32.totalorder %s22, 2
    %p260 = por %p258, %p259
    %p261 = scmp.ne.s32.totalorder %s252, %s253
    %p262 = scmp.eq.s32.totalorder %s22, 0
    %p263 = por %p261, %p262
    %p264 = scmp.ne.s32.totalorder %s252, %s253
    %p265 = scmp.eq.s32.totalorder %s23, 2
    %p266 = por %p264, %p265
    %p268 = scmp.ne.s32.totalorder %s253, %s267
    %p269 = scmp.eq.s32.totalorder %s23, 0
    %p270 = por %p268, %p269
    %s271 = ssub.s32 %s17, %s24
    %p272 = scmp.eq.s32.totalorder %s271, 0
    %s274 = sadd.s32 %s273, 1
    %s275 = scalar_select %p272, %s273, %s274
    %p278 = pneg %p272
    %p279 = scmp.eq.s32.totalorder %s17, 2
    %p280 = por %p278, %p279
    %p281 = scmp.ne.s32.totalorder %s273, %s276
    %p282 = scmp.eq.s32.totalorder %s17, 0
    %p283 = por %p281, %p282
    %p284 = scmp.ne.s32.totalorder %s273, %s276
    %p285 = scmp.eq.s32.totalorder %s22, 2
    %p286 = por %p284, %p285
    %p287 = scmp.ne.s32.totalorder %s276, %s277
    %p288 = scmp.eq.s32.totalorder %s22, 0
    %p289 = por %p287, %p288
    %p290 = scmp.ne.s32.totalorder %s276, %s277
    %p291 = scmp.eq.s32.totalorder %s23, 2
    %p292 = por %p290, %p291
    %p294 = scmp.ne.s32.totalorder %s277, %s293
    %p295 = scmp.eq.s32.totalorder %s23, 0
    %p296 = por %p294, %p295
    %p297 = scmp.le.s32.totalorder 1, %s17
    %p298 = scmp.lt.s32.totalorder %s17, 4
    %p299 = pnand %p297, %p298
    %p300 = pneg %p299
    // Predicated region
    $region9: #{tpu_custom_call.1} parent=5 // pred_check
      _
    $region10: #{tpu_custom_call.1} parent=5 // pred_check_branch
      %302 = sbr.rel (%p299) target = $region12
    $region11: #{tpu_custom_call.1} parent=5 // pred_region
      %s303 = ssub.s32 %s17, 1
      // Predicated region
      $region13: #{tpu_custom_call.1} parent=11 // pred_check
        %p304 = pneg %p116
      $region14: #{tpu_custom_call.1} parent=11 // pred_check_branch
        %306 = sbr.rel (%p304) target = $region16
      $region15: #{tpu_custom_call.1} parent=11 // pred_region
        _
      $region16: #{tpu_custom_call.1} parent=11 // pred_fallthru
        _
      // Predicated region
      $region17: #{tpu_custom_call.1} parent=11 // pred_check
        %p307 = pneg %p137
      $region18: #{tpu_custom_call.1} parent=11 // pred_check_branch
        %309 = sbr.rel (%p307) target = $region20
      $region19: #{tpu_custom_call.1} parent=11 // pred_region
        _
      $region20: #{tpu_custom_call.1} parent=11 // pred_fallthru
        _
      // Predicated region
      $region21: #{tpu_custom_call.1} parent=11 // pred_check
        %p310 = pneg %p158
      $region22: #{tpu_custom_call.1} parent=11 // pred_check_branch
        %312 = sbr.rel (%p310) target = $region24
      $region23: #{tpu_custom_call.1} parent=11 // pred_region
        _
      $region24: #{tpu_custom_call.1} parent=11 // pred_fallthru
        _
      // Predicated region
      $region25: #{tpu_custom_call.1} parent=11 // pred_check
        %p313 = pneg %p179
      $region26: #{tpu_custom_call.1} parent=11 // pred_check_branch
        %315 = sbr.rel (%p313) target = $region28
      $region27: #{tpu_custom_call.1} parent=11 // pred_region
        _
      $region28: #{tpu_custom_call.1} parent=11 // pred_fallthru
        _
      // Predicated region
      $region29: #{tpu_custom_call.1} parent=11 // pred_check
        %p316 = pneg %p200
      $region30: #{tpu_custom_call.1} parent=11 // pred_check_branch
        %318 = sbr.rel (%p316) target = $region32
      $region31: #{tpu_custom_call.1} parent=11 // pred_region
        _
      $region32: #{tpu_custom_call.1} parent=11 // pred_fallthru
        _
      // Predicated region
      $region33: #{tpu_custom_call.1} parent=11 // pred_check
        %p319 = pneg %p221
      $region34: #{tpu_custom_call.1} parent=11 // pred_check_branch
        %321 = sbr.rel (%p319) target = $region36
      $region35: #{tpu_custom_call.1} parent=11 // pred_region
        _
      $region36: #{tpu_custom_call.1} parent=11 // pred_fallthru
        _
      // Predicated region
      $region37: #{tpu_custom_call.1} parent=11 // pred_check
        %p322 = pneg %p242
      $region38: #{tpu_custom_call.1} parent=11 // pred_check_branch
        %324 = sbr.rel (%p322) target = $region40
      $region39: #{tpu_custom_call.1} parent=11 // pred_region
        _
      $region40: #{tpu_custom_call.1} parent=11 // pred_fallthru
        _
      // Predicated region
      $region41: #{tpu_custom_call.1} parent=11 // pred_check
        %p325 = pneg %p263
      $region42: #{tpu_custom_call.1} parent=11 // pred_check_branch
        %327 = sbr.rel (%p325) target = $region44
      $region43: #{tpu_custom_call.1} parent=11 // pred_region
        _
      $region44: #{tpu_custom_call.1} parent=11 // pred_fallthru
        _
    $region12: #{tpu_custom_call.1} parent=5 // pred_fallthru
      _
    %p328 = scmp.lt.s32.totalorder %s17, 3
    // Predicated region
    $region45: #{tpu_custom_call.1} parent=5 // pred_check
      %p329 = pneg %p328
    $region46: #{tpu_custom_call.1} parent=5 // pred_check_branch
      %331 = sbr.rel (%p329) target = $region48
    $region47: #{tpu_custom_call.1} parent=5 // pred_region
      // Predicated region
      $region49: #{tpu_custom_call.1} parent=47 // pred_check
        %p332 = pneg %p37
      $region50: #{tpu_custom_call.1} parent=47 // pred_check_branch
        %334 = sbr.rel (%p332) target = $region52
      $region51: #{tpu_custom_call.1} parent=47 // pred_region
        %s335 = smul.u32 6, %s17
        %p336 = scmp.lt.s32.totalorder %s335, 17
        %s337 = scalar_select %p336, %s335, 17
        %s338 = smul.addr %s337, 8
        %s339 = scalar_lea.vmem %s0, %s338
        %s340 = smul.u32 6, %s17
      $region52: #{tpu_custom_call.1} parent=47 // pred_fallthru
        _
      // Predicated region
      $region53: #{tpu_custom_call.1} parent=47 // pred_check
        %p341 = pneg %p63
      $region54: #{tpu_custom_call.1} parent=47 // pred_check_branch
        %343 = sbr.rel (%p341) target = $region56
      $region55: #{tpu_custom_call.1} parent=47 // pred_region
        %s344 = smul.u32 8, %s17
        %p345 = scmp.lt.s32.totalorder %s344, 23
        %s346 = scalar_select %p345, %s344, 23
        %s347 = smul.addr %s346, 8
        %s348 = scalar_lea.vmem %s1, %s347
        %s349 = smul.u32 8, %s17
      $region56: #{tpu_custom_call.1} parent=47 // pred_fallthru
        _
      // Predicated region
      $region57: #{tpu_custom_call.1} parent=47 // pred_check
        %p350 = pneg %p89
      $region58: #{tpu_custom_call.1} parent=47 // pred_check_branch
        %352 = sbr.rel (%p350) target = $region60
      $region59: #{tpu_custom_call.1} parent=47 // pred_region
        %s353 = smul.u32 2, %s17
        %p354 = scmp.lt.s32.totalorder %s353, 5
        %s355 = scalar_select %p354, %s353, 5
        %s356 = smul.addr %s355, 8
        %s357 = scalar_lea.vmem %s2, %s356
        %s358 = smul.u32 2, %s17
      $region60: #{tpu_custom_call.1} parent=47 // pred_fallthru
        _
    $region48: #{tpu_custom_call.1} parent=5 // pred_fallthru
      _
    %p359 = scmp.le.s32.totalorder 1, %s17
    %p360 = scmp.lt.s32.totalorder %s17, 4
    %p361 = pnand %p359, %p360
    %p362 = pneg %p361
    // Predicated region
    $region61: #{tpu_custom_call.1} parent=5 // pred_check
      _
    $region62: #{tpu_custom_call.1} parent=5 // pred_check_branch
      %364 = sbr.rel (%p361) target = $region64
    $region63: #{tpu_custom_call.1} parent=5 // pred_region
      %s365 = ssub.s32 %s17, 1
      %s366 = smul.u32 6, %s22
      %p367 = scmp.lt.s32.totalorder %s366, 17
      %s368 = scalar_select %p367, %s366, 17
      %s369 = smul.addr %s368, 8
      %s370 = scalar_lea.vmem %s0, %s369
      %p371 = pneg %p43
      %p372 = pneg %p40
      %s373 = smul.u32 8, %s22
      %p374 = scmp.lt.s32.totalorder %s373, 23
      %s375 = scalar_select %p374, %s373, 23
      %s376 = smul.addr %s375, 8
      %s377 = scalar_lea.vmem %s1, %s376
      %p378 = pneg %p69
      %p379 = pneg %p66
      %s380 = smul.u32 2, %s22
      %p381 = scmp.lt.s32.totalorder %s380, 5
      %s382 = scalar_select %p381, %s380, 5
      %s383 = smul.addr %s382, 8
      %s384 = scalar_lea.vmem %s2, %s383
      %p385 = pneg %p95
      %p386 = pneg %p92
      %p387 = pneg %p116
      %p388 = pneg %p113
      %p389 = pneg %p137
      %p390 = pneg %p134
      %p391 = pneg %p158
      %p392 = pneg %p155
      %p393 = pneg %p179
      %p394 = pneg %p176
      %p395 = pneg %p200
      %p396 = pneg %p197
      %p397 = pneg %p221
      %p398 = pneg %p218
      %p399 = pneg %p242
      %p400 = pneg %p239
      %p401 = pneg %p263
      %p402 = pneg %p260
      %p403 = pneg %p289
      %p404 = pneg %p286
      %s405 = smul.u32 2, %s22
      %p406 = scmp.lt.s32.totalorder %s405, 5
      %s407 = scalar_select %p406, %s405, 5
      %s408 = smul.addr %s407, 8
      %s409 = scalar_lea.vmem %s11, %s408
      %s410 = smul.u32 6, %s22
      %p411 = scmp.lt.s32.totalorder %s410, 17
      %s412 = scalar_select %p411, %s410, 17
      %s413 = smul.addr %s412, 8
      %s414 = scalar_lea.vmem %s0, %s413
      %s415 = smul.u32 6, %s22
      %s416 = smul.u32 8, %s22
      %p417 = scmp.lt.s32.totalorder %s416, 23
      %s418 = scalar_select %p417, %s416, 23
      %s419 = smul.addr %s418, 8
      %s420 = scalar_lea.vmem %s1, %s419
      %s421 = smul.u32 8, %s22
      %s422 = smul.u32 2, %s22
      %p423 = scmp.lt.s32.totalorder %s422, 5
      %s424 = scalar_select %p423, %s422, 5
      %s425 = smul.addr %s424, 8
      %s426 = scalar_lea.vmem %s2, %s425
      %s427 = smul.u32 2, %s22
      %s428 = smul.u32 2, %s22
      %p429 = scmp.lt.s32.totalorder %s428, 5
      %s430 = scalar_select %p429, %s428, 5
      %s431 = smul.addr %s430, 8
      %s432 = scalar_lea.vmem %s11, %s431
      %s433 = smul.u32 2, %s22
      %v434 = vld [vmem:[%s414] sm:$0xff]
      %v435 = vld [vmem:[%s414 + $0x8] sm:$0xff]
      %v436 = vld [vmem:[%s414 + $0x10] sm:$0xff]
      %v437 = vld [vmem:[%s414 + $0x18] sm:$0xff]
      %v438 = vld [vmem:[%s414 + $0x20] sm:$0xff]
      %v439 = vld [vmem:[%s414 + $0x28] sm:$0xff]
      %v440 = vld [vmem:[%s3] sm:$0x7f]
      %v441 = vld [vmem:[%s4] sm:$0x1]
      %v443 = vlaneseq
      %v444 = vshrl.u32 %v443, 7
      %v445 = vsub.s32 0, %v444
      %v446 = vrot.slane %v441, %v445
      %vm448 = vcmask 56320
      %v450 = vsel %vm448, %v434, 0
      %v453 = vsel %vm448, %v435, 0
      %v456 = vsel %vm448, %v436, 0
      %v459 = vsel %vm448, %v437, 0
      %v462 = vsel %vm448, %v438, 0
      %v465 = vsel %vm448, %v439, 0
      %vm467 = vcmask 1046528
      %v469 = vsel %vm467, %v440, 0
      %471 = vmatprep.subr.mxu0 0.0
      %472 = vmatpush1.msra.mxu0 %v469
      %473 = vmatprep.subr.mxu0 0.0
      %474 = vmatpush1.msra.mxu0 0.0
      %475 = vmatprep.subr.mxu0 0.0
      %476 = vmatpush1.msra.mxu0 0.0
      %477 = vmatprep.subr.mxu0 0.0
      %478 = vmatpush1.msra.mxu0 0.0
      %479 = vmatprep.subr.mxu0 0.0
      %480 = vmatpush1.msra.mxu0 0.0
      %481 = vmatprep.subr.mxu0 0.0
      %482 = vmatpush1.msra.mxu0 0.0
      %483 = vmatprep.subr.mxu0 0.0
      %484 = vmatpush1.msra.mxu0 0.0
      %485 = vmatprep.subr.mxu0 0.0
      %486 = vmatpush1.msra.mxu0 0.0
      %487 = vmatprep.subr.mxu0 0.0
      %488 = vmatpush1.msra.mxu0 0.0
      %489 = vmatprep.subr.mxu0 0.0
      %490 = vmatpush1.msra.mxu0 0.0
      %491 = vmatprep.subr.mxu0 0.0
      %492 = vmatpush1.msra.mxu0 0.0
      %493 = vmatprep.subr.mxu0 0.0
      %494 = vmatpush1.msra.mxu0 0.0
      %495 = vmatprep.subr.mxu0 0.0
      %496 = vmatpush1.msra.mxu0 0.0
      %497 = vmatprep.subr.mxu0 0.0
      %498 = vmatpush1.msra.mxu0 0.0
      %499 = vmatprep.subr.mxu0 0.0
      %500 = vmatpush1.msra.mxu0 0.0
      %501 = vmatprep.subr.mxu0 0.0
      %502 = vmatpush1.msra.mxu0 0.0
      %503 = vmatprep.subr.mxu0 0.0
      %504 = vmatpush1.msra.mxu0 0.0
      %505 = vmatprep.subr.mxu0 0.0
      %506 = vmatpush1.msra.mxu0 0.0
      %507 = vmatprep.subr.mxu0 0.0
      %508 = vmatpush1.msra.mxu0 0.0
      %509 = vmatprep.subr.mxu0 0.0
      %510 = vmatpush1.msra.mxu0 0.0
      %511 = vmatprep.subr.mxu0 0.0
      %512 = vmatpush1.msra.mxu0 0.0
      %513 = vmatprep.subr.mxu0 0.0
      %514 = vmatpush1.msra.mxu0 0.0
      %515 = vmatprep.subr.mxu0 0.0
      %516 = vmatpush1.msra.mxu0 0.0
      %517 = vmatprep.subr.mxu0 0.0
      %518 = vmatpush1.msra.mxu0 0.0
      %519 = vmatprep.subr.mxu0 0.0
      %520 = vmatpush1.msra.mxu0 0.0
      %521 = vmatprep.subr.mxu0 0.0
      %522 = vmatpush1.msra.mxu0 0.0
      %523 = vmatprep.subr.mxu0 0.0
      %524 = vmatpush1.msra.mxu0 0.0
      %525 = vmatprep.subr.mxu0 0.0
      %526 = vmatpush1.msra.mxu0 0.0
      %527 = vmatprep.subr.mxu0 0.0
      %528 = vmatpush1.msra.mxu0 0.0
      %529 = vmatprep.subr.mxu0 0.0
      %530 = vmatpush1.msra.mxu0 0.0
      %531 = vmatprep.subr.mxu0 0.0
      %532 = vmatpush1.msra.mxu0 0.0
      %533 = vmatprep.subr.mxu0 0.0
      %534 = vmatpush1.msra.mxu0 0.0
      %535 = vmatprep.mubr.f32.mxu0 0.0
      %536 = vmatmul.mubr.f32.gmra.mrb[0].mxu0 %v450
      %v537 = vpop.f32.mrb[0].mxu0
      %v538 = vadd.f32 %v446, %v537
      %v539 = vpop.f32.mrb[0].mxu0
      %540 = vmatprep.mubr.f32.mxu0 0.0
      %541 = vmatmul.mubr.f32.gmra.mrb[0].mxu0 %v453
      %v542 = vpop.f32.mrb[0].mxu0
      %v543 = vadd.f32 %v446, %v542
      %v544 = vpop.f32.mrb[0].mxu0
      %545 = vmatprep.mubr.f32.mxu0 0.0
      %546 = vmatmul.mubr.f32.gmra.mrb[0].mxu0 %v456
      %v547 = vpop.f32.mrb[0].mxu0
      %v548 = vadd.f32 %v446, %v547
      %v549 = vpop.f32.mrb[0].mxu0
      %550 = vmatprep.mubr.f32.mxu0 0.0
      %551 = vmatmul.mubr.f32.gmra.mrb[0].mxu0 %v459
      %v552 = vpop.f32.mrb[0].mxu0
      %v553 = vadd.f32 %v446, %v552
      %v554 = vpop.f32.mrb[0].mxu0
      %555 = vmatprep.mubr.f32.mxu0 0.0
      %556 = vmatmul.mubr.f32.gmra.mrb[0].mxu0 %v462
      %v557 = vpop.f32.mrb[0].mxu0
      %v558 = vadd.f32 %v446, %v557
      %v559 = vpop.f32.mrb[0].mxu0
      %560 = vmatprep.mubr.f32.mxu0 0.0
      %561 = vmatmul.mubr.f32.gmra.mrb[0].mxu0 %v465
      %v562 = vpop.f32.mrb[0].mxu0
      %v563 = vadd.f32 %v446, %v562
      %v564 = vpop.f32.mrb[0].mxu0
      %565 = vdwg.mxu0
      %v566 = vmax.f32 %v538, 0.0
      %v567 = vmax.f32 %v543, 0.0
      %v568 = vmax.f32 %v548, 0.0
      %v569 = vmax.f32 %v553, 0.0
      %v570 = vmax.f32 %v558, 0.0
      %v571 = vmax.f32 %v563, 0.0
      %v572 = vld [vmem:[%s420] sm:$0xff]
      %v573 = vld [vmem:[%s420 + $0x8] sm:$0xff]
      %v574 = vld [vmem:[%s420 + $0x10] sm:$0xff]
      %v575 = vld [vmem:[%s420 + $0x18] sm:$0xff]
      %v576 = vld [vmem:[%s420 + $0x20] sm:$0xff]
      %v577 = vld [vmem:[%s420 + $0x28] sm:$0xff]
      %v578 = vld [vmem:[%s420 + $0x30] sm:$0xff]
      %v579 = vld [vmem:[%s420 + $0x38] sm:$0xff]
      %v580 = vld [vmem:[%s6] sm:$0x3f]
      %v581 = vld [vmem:[%s7] sm:$0x1]
      %v583 = vlaneseq
      %v584 = vshrl.u32 %v583, 7
      %v585 = vsub.s32 0, %v584
      %v586 = vrot.slane %v581, %v585
      %vm588 = vcmask 48128
      %v590 = vsel %vm588, %v572, 0
      %v593 = vsel %vm588, %v573, 0
      %v596 = vsel %vm588, %v574, 0
      %v599 = vsel %vm588, %v575, 0
      %v602 = vsel %vm588, %v576, 0
      %v605 = vsel %vm588, %v577, 0
      %v608 = vsel %vm588, %v578, 0
      %v611 = vsel %vm588, %v579, 0
      %vm613 = vcmask 1045504
      %v615 = vsel %vm613, %v580, 0
      %617 = vmatprep.subr.mxu0 0.0
      %618 = vmatpush1.msra.mxu0 %v615
      %619 = vmatprep.subr.mxu0 0.0
      %620 = vmatpush1.msra.mxu0 0.0
      %621 = vmatprep.subr.mxu0 0.0
      %622 = vmatpush1.msra.mxu0 0.0
      %623 = vmatprep.subr.mxu0 0.0
      %624 = vmatpush1.msra.mxu0 0.0
      %625 = vmatprep.subr.mxu0 0.0
      %626 = vmatpush1.msra.mxu0 0.0
      %627 = vmatprep.subr.mxu0 0.0
      %628 = vmatpush1.msra.mxu0 0.0
      %629 = vmatprep.subr.mxu0 0.0
      %630 = vmatpush1.msra.mxu0 0.0
      %631 = vmatprep.subr.mxu0 0.0
      %632 = vmatpush1.msra.mxu0 0.0
      %633 = vmatprep.subr.mxu0 0.0
      %634 = vmatpush1.msra.mxu0 0.0
      %635 = vmatprep.subr.mxu0 0.0
      %636 = vmatpush1.msra.mxu0 0.0
      %637 = vmatprep.subr.mxu0 0.0
      %638 = vmatpush1.msra.mxu0 0.0
      %639 = vmatprep.subr.mxu0 0.0
      %640 = vmatpush1.msra.mxu0 0.0
      %641 = vmatprep.subr.mxu0 0.0
      %642 = vmatpush1.msra.mxu0 0.0
      %643 = vmatprep.subr.mxu0 0.0
      %644 = vmatpush1.msra.mxu0 0.0
      %645 = vmatprep.subr.mxu0 0.0
      %646 = vmatpush1.msra.mxu0 0.0
      %647 = vmatprep.subr.mxu0 0.0
      %648 = vmatpush1.msra.mxu0 0.0
      %649 = vmatprep.subr.mxu0 0.0
      %650 = vmatpush1.msra.mxu0 0.0
      %651 = vmatprep.subr.mxu0 0.0
      %652 = vmatpush1.msra.mxu0 0.0
      %653 = vmatprep.subr.mxu0 0.0
      %654 = vmatpush1.msra.mxu0 0.0
      %655 = vmatprep.subr.mxu0 0.0
      %656 = vmatpush1.msra.mxu0 0.0
      %657 = vmatprep.subr.mxu0 0.0
      %658 = vmatpush1.msra.mxu0 0.0
      %659 = vmatprep.subr.mxu0 0.0
      %660 = vmatpush1.msra.mxu0 0.0
      %661 = vmatprep.subr.mxu0 0.0
      %662 = vmatpush1.msra.mxu0 0.0
      %663 = vmatprep.subr.mxu0 0.0
      %664 = vmatpush1.msra.mxu0 0.0
      %665 = vmatprep.subr.mxu0 0.0
      %666 = vmatpush1.msra.mxu0 0.0
      %667 = vmatprep.subr.mxu0 0.0
      %668 = vmatpush1.msra.mxu0 0.0
      %669 = vmatprep.subr.mxu0 0.0
      %670 = vmatpush1.msra.mxu0 0.0
      %671 = vmatprep.subr.mxu0 0.0
      %672 = vmatpush1.msra.mxu0 0.0
      %673 = vmatprep.subr.mxu0 0.0
      %674 = vmatpush1.msra.mxu0 0.0
      %675 = vmatprep.subr.mxu0 0.0
      %676 = vmatpush1.msra.mxu0 0.0
      %677 = vmatprep.subr.mxu0 0.0
      %678 = vmatpush1.msra.mxu0 0.0
      %679 = vmatprep.subr.mxu0 0.0
      %680 = vmatpush1.msra.mxu0 0.0
      %681 = vmatprep.mubr.f32.mxu0 0.0
      %682 = vmatmul.mubr.f32.gmra.mrb[0].mxu0 %v590
      %v683 = vpop.f32.mrb[0].mxu0
      %v684 = vadd.f32 %v586, %v683
      %v685 = vpop.f32.mrb[0].mxu0
      %686 = vmatprep.mubr.f32.mxu0 0.0
      %687 = vmatmul.mubr.f32.gmra.mrb[0].mxu0 %v593
      %v688 = vpop.f32.mrb[0].mxu0
      %v689 = vadd.f32 %v586, %v688
      %v690 = vpop.f32.mrb[0].mxu0
      %691 = vmatprep.mubr.f32.mxu0 0.0
      %692 = vmatmul.mubr.f32.gmra.mrb[0].mxu0 %v596
      %v693 = vpop.f32.mrb[0].mxu0
      %v694 = vadd.f32 %v586, %v693
      %v695 = vpop.f32.mrb[0].mxu0
      %696 = vmatprep.mubr.f32.mxu0 0.0
      %697 = vmatmul.mubr.f32.gmra.mrb[0].mxu0 %v599
      %v698 = vpop.f32.mrb[0].mxu0
      %v699 = vadd.f32 %v586, %v698
      %v700 = vpop.f32.mrb[0].mxu0
      %701 = vmatprep.mubr.f32.mxu0 0.0
      %702 = vmatmul.mubr.f32.gmra.mrb[0].mxu0 %v602
      %v703 = vpop.f32.mrb[0].mxu0
      %v704 = vadd.f32 %v586, %v703
      %v705 = vpop.f32.mrb[0].mxu0
      %706 = vmatprep.mubr.f32.mxu0 0.0
      %707 = vmatmul.mubr.f32.gmra.mrb[0].mxu0 %v605
      %v708 = vpop.f32.mrb[0].mxu0
      %v709 = vadd.f32 %v586, %v708
      %v710 = vpop.f32.mrb[0].mxu0
      %711 = vmatprep.mubr.f32.mxu0 0.0
      %712 = vmatmul.mubr.f32.gmra.mrb[0].mxu0 %v608
      %v713 = vpop.f32.mrb[0].mxu0
      %v714 = vadd.f32 %v586, %v713
      %v715 = vpop.f32.mrb[0].mxu0
      %716 = vmatprep.mubr.f32.mxu0 0.0
      %717 = vmatmul.mubr.f32.gmra.mrb[0].mxu0 %v611
      %v718 = vpop.f32.mrb[0].mxu0
      %v719 = vadd.f32 %v586, %v718
      %v720 = vpop.f32.mrb[0].mxu0
      %721 = vdwg.mxu0
      %v722 = vmax.f32 %v684, 0.0
      %v723 = vmax.f32 %v689, 0.0
      %v724 = vmax.f32 %v694, 0.0
      %v725 = vmax.f32 %v699, 0.0
      %v726 = vmax.f32 %v704, 0.0
      %v727 = vmax.f32 %v709, 0.0
      %v728 = vmax.f32 %v714, 0.0
      %v729 = vmax.f32 %v719, 0.0
      %v730 = vadd.f32 %v566, %v568
      %v731 = vadd.f32 %v567, %v569
      %v732 = vadd.f32 %v730, %v570
      %v733 = vadd.f32 %v731, %v571
      %v734 = vadd.f32 %v722, %v724
      %v735 = vadd.f32 %v723, %v725
      %v736 = vadd.f32 %v734, %v726
      %v737 = vadd.f32 %v735, %v727
      %v738 = vadd.f32 %v736, %v728
      %v739 = vadd.f32 %v737, %v729
      %v740 = vld [vmem:[%s10] sm:$0x1]
      %v741 = vld [vmem:[%s426] sm:$0xff]
      %v742 = vld [vmem:[%s426 + $0x8] sm:$0xff]
      %v743 = vld [vmem:[%s9] sm:$0x1]
      %745 = vset.pattern.permute.xlu0 0
      %746 = vperm.xlu0 %745, %v741
      %v747 = vpop.permute.xlu0 %746
      %750 = vset.pattern.permute.xlu0 0
      %751 = vperm.xlu0 %750, %v742
      %v752 = vpop.permute.xlu0 %751
      %v755 = vlaneseq
      %v756 = vshrl.u32 %v755, 7
      %v757 = vsub.s32 0, %v756
      %v758 = vrot.slane %v743, %v757
      %v760 = vmul.f32 %v747, %v758
      %v761 = vmul.f32 %v752, %v758
      %v763 = vlaneseq
      %v764 = vshrl.u32 %v763, 7
      %v765 = vsub.s32 0, %v764
      %v766 = vrot.slane %v740, %v765
      %v768 = vadd.f32 %v766, %v760
      %v769 = vadd.f32 %v766, %v761
      %v770 = vld [vmem:[%s5] sm:$0xff]
      %v771 = vld [vmem:[%s5 + $0x8] sm:$0xff]
      %vm772 = vcmask 130048
      %v774 = vsel %vm772, %v732, 0
      %v777 = vsel %vm772, %v733, 0
      %779 = vmatprep.subr.mxu0 0.0
      %780 = vmatpush1.msra.mxu0 %v770
      %781 = vmatprep.subr.mxu0 0.0
      %782 = vmatpush1.msra.mxu0 %v771
      %783 = vmatprep.subr.mxu0 0.0
      %784 = vmatpush1.msra.mxu0 0.0
      %785 = vmatprep.subr.mxu0 0.0
      %786 = vmatpush1.msra.mxu0 0.0
      %787 = vmatprep.subr.mxu0 0.0
      %788 = vmatpush1.msra.mxu0 0.0
      %789 = vmatprep.subr.mxu0 0.0
      %790 = vmatpush1.msra.mxu0 0.0
      %791 = vmatprep.subr.mxu0 0.0
      %792 = vmatpush1.msra.mxu0 0.0
      %793 = vmatprep.subr.mxu0 0.0
      %794 = vmatpush1.msra.mxu0 0.0
      %795 = vmatprep.subr.mxu0 0.0
      %796 = vmatpush1.msra.mxu0 0.0
      %797 = vmatprep.subr.mxu0 0.0
      %798 = vmatpush1.msra.mxu0 0.0
      %799 = vmatprep.subr.mxu0 0.0
      %800 = vmatpush1.msra.mxu0 0.0
      %801 = vmatprep.subr.mxu0 0.0
      %802 = vmatpush1.msra.mxu0 0.0
      %803 = vmatprep.subr.mxu0 0.0
      %804 = vmatpush1.msra.mxu0 0.0
      %805 = vmatprep.subr.mxu0 0.0
      %806 = vmatpush1.msra.mxu0 0.0
      %807 = vmatprep.subr.mxu0 0.0
      %808 = vmatpush1.msra.mxu0 0.0
      %809 = vmatprep.subr.mxu0 0.0
      %810 = vmatpush1.msra.mxu0 0.0
      %811 = vmatprep.subr.mxu0 0.0
      %812 = vmatpush1.msra.mxu0 0.0
      %813 = vmatprep.subr.mxu0 0.0
      %814 = vmatpush1.msra.mxu0 0.0
      %815 = vmatprep.subr.mxu0 0.0
      %816 = vmatpush1.msra.mxu0 0.0
      %817 = vmatprep.subr.mxu0 0.0
      %818 = vmatpush1.msra.mxu0 0.0
      %819 = vmatprep.subr.mxu0 0.0
      %820 = vmatpush1.msra.mxu0 0.0
      %821 = vmatprep.subr.mxu0 0.0
      %822 = vmatpush1.msra.mxu0 0.0
      %823 = vmatprep.subr.mxu0 0.0
      %824 = vmatpush1.msra.mxu0 0.0
      %825 = vmatprep.subr.mxu0 0.0
      %826 = vmatpush1.msra.mxu0 0.0
      %827 = vmatprep.subr.mxu0 0.0
      %828 = vmatpush1.msra.mxu0 0.0
      %829 = vmatprep.subr.mxu0 0.0
      %830 = vmatpush1.msra.mxu0 0.0
      %831 = vmatprep.subr.mxu0 0.0
      %832 = vmatpush1.msra.mxu0 0.0
      %833 = vmatprep.subr.mxu0 0.0
      %834 = vmatpush1.msra.mxu0 0.0
      %835 = vmatprep.subr.mxu0 0.0
      %836 = vmatpush1.msra.mxu0 0.0
      %837 = vmatprep.subr.mxu0 0.0
      %838 = vmatpush1.msra.mxu0 0.0
      %839 = vmatprep.subr.mxu0 0.0
      %840 = vmatpush1.msra.mxu0 0.0
      %841 = vmatprep.subr.mxu0 0.0
      %842 = vmatpush1.msra.mxu0 0.0
      %843 = vmatprep.mubr.f32.mxu0 0.0
      %844 = vmatmul.mubr.f32.gmra.mrb[0].mxu0 %v774
      %v845 = vpop.f32.mrb[0].mxu0
      %v846 = vadd.f32 0.0, %v845
      %v847 = vpop.f32.mrb[0].mxu0
      %848 = vmatprep.mubr.f32.mxu0 0.0
      %849 = vmatmul.mubr.f32.gmra.mrb[0].mxu0 %v777
      %v850 = vpop.f32.mrb[0].mxu0
      %v851 = vadd.f32 0.0, %v850
      %v852 = vpop.f32.mrb[0].mxu0
      %853 = vdwg.mxu0
      %v854 = vadd.f32 %v768, %v846
      %v855 = vadd.f32 %v769, %v851
      %v856 = vld [vmem:[%s8] sm:$0xff]
      %v857 = vld [vmem:[%s8 + $0x8] sm:$0xff]
      %v859 = vsel %vm772, %v738, 0
      %v862 = vsel %vm772, %v739, 0
      %864 = vmatprep.subr.mxu0 0.0
      %865 = vmatpush1.msra.mxu0 %v856
      %866 = vmatprep.subr.mxu0 0.0
      %867 = vmatpush1.msra.mxu0 %v857
      %868 = vmatprep.subr.mxu0 0.0
      %869 = vmatpush1.msra.mxu0 0.0
      %870 = vmatprep.subr.mxu0 0.0
      %871 = vmatpush1.msra.mxu0 0.0
      %872 = vmatprep.subr.mxu0 0.0
      %873 = vmatpush1.msra.mxu0 0.0
      %874 = vmatprep.subr.mxu0 0.0
      %875 = vmatpush1.msra.mxu0 0.0
      %876 = vmatprep.subr.mxu0 0.0
      %877 = vmatpush1.msra.mxu0 0.0
      %878 = vmatprep.subr.mxu0 0.0
      %879 = vmatpush1.msra.mxu0 0.0
      %880 = vmatprep.subr.mxu0 0.0
      %881 = vmatpush1.msra.mxu0 0.0
      %882 = vmatprep.subr.mxu0 0.0
      %883 = vmatpush1.msra.mxu0 0.0
      %884 = vmatprep.subr.mxu0 0.0
      %885 = vmatpush1.msra.mxu0 0.0
      %886 = vmatprep.subr.mxu0 0.0
      %887 = vmatpush1.msra.mxu0 0.0
      %888 = vmatprep.subr.mxu0 0.0
      %889 = vmatpush1.msra.mxu0 0.0
      %890 = vmatprep.subr.mxu0 0.0
      %891 = vmatpush1.msra.mxu0 0.0
      %892 = vmatprep.subr.mxu0 0.0
      %893 = vmatpush1.msra.mxu0 0.0
      %894 = vmatprep.subr.mxu0 0.0
      %895 = vmatpush1.msra.mxu0 0.0
      %896 = vmatprep.subr.mxu0 0.0
      %897 = vmatpush1.msra.mxu0 0.0
      %898 = vmatprep.subr.mxu0 0.0
      %899 = vmatpush1.msra.mxu0 0.0
      %900 = vmatprep.subr.mxu0 0.0
      %901 = vmatpush1.msra.mxu0 0.0
      %902 = vmatprep.subr.mxu0 0.0
      %903 = vmatpush1.msra.mxu0 0.0
      %904 = vmatprep.subr.mxu0 0.0
      %905 = vmatpush1.msra.mxu0 0.0
      %906 = vmatprep.subr.mxu0 0.0
      %907 = vmatpush1.msra.mxu0 0.0
      %908 = vmatprep.subr.mxu0 0.0
      %909 = vmatpush1.msra.mxu0 0.0
      %910 = vmatprep.subr.mxu0 0.0
      %911 = vmatpush1.msra.mxu0 0.0
      %912 = vmatprep.subr.mxu0 0.0
      %913 = vmatpush1.msra.mxu0 0.0
      %914 = vmatprep.subr.mxu0 0.0
      %915 = vmatpush1.msra.mxu0 0.0
      %916 = vmatprep.subr.mxu0 0.0
      %917 = vmatpush1.msra.mxu0 0.0
      %918 = vmatprep.subr.mxu0 0.0
      %919 = vmatpush1.msra.mxu0 0.0
      %920 = vmatprep.subr.mxu0 0.0
      %921 = vmatpush1.msra.mxu0 0.0
      %922 = vmatprep.subr.mxu0 0.0
      %923 = vmatpush1.msra.mxu0 0.0
      %924 = vmatprep.subr.mxu0 0.0
      %925 = vmatpush1.msra.mxu0 0.0
      %926 = vmatprep.subr.mxu0 0.0
      %927 = vmatpush1.msra.mxu0 0.0
      %928 = vmatprep.mubr.f32.mxu0 0.0
      %929 = vmatmul.mubr.f32.gmra.mrb[0].mxu0 %v859
      %v930 = vpop.f32.mrb[0].mxu0
      %v931 = vadd.f32 0.0, %v930
      %v932 = vpop.f32.mrb[0].mxu0
      %933 = vmatprep.mubr.f32.mxu0 0.0
      %934 = vmatmul.mubr.f32.gmra.mrb[0].mxu0 %v862
      %v935 = vpop.f32.mrb[0].mxu0
      %v936 = vadd.f32 0.0, %v935
      %v937 = vpop.f32.mrb[0].mxu0
      %938 = vdwg.mxu0
      %v939 = vadd.f32 %v854, %v931
      %v940 = vadd.f32 %v855, %v936
      %vm941 = vcmask 261120
      %942 = vst.msk [vmem:[%s432] sm:$0xff] %vm941, %v939
      %943 = vst.msk [vmem:[%s432 + $0x8] sm:$0xff] %vm941, %v940
      %s944 = smul.u32 2, %s22
      %p945 = scmp.lt.s32.totalorder %s944, 5
      %s946 = scalar_select %p945, %s944, 5
      %s947 = smul.addr %s946, 8
      %s948 = scalar_lea.vmem %s11, %s947
      // Predicated region
      $region65: #{tpu_custom_call.1} parent=63 // pred_check
        %p949 = pneg %p286
      $region66: #{tpu_custom_call.1} parent=63 // pred_check_branch
        %951 = sbr.rel (%p949) target = $region68
      $region67: #{tpu_custom_call.1} parent=63 // pred_region
        %s952 = smul.u32 2, %s22
      $region68: #{tpu_custom_call.1} parent=63 // pred_fallthru
        _
    $region64: #{tpu_custom_call.1} parent=5 // pred_fallthru
      _
    %p953 = scmp.le.s32.totalorder 2, %s17
    // Predicated region
    $region69: #{tpu_custom_call.1} parent=5 // pred_check
      %p954 = pneg %p953
    $region70: #{tpu_custom_call.1} parent=5 // pred_check_branch
      %956 = sbr.rel (%p954) target = $region72
    $region71: #{tpu_custom_call.1} parent=5 // pred_region
      %s957 = ssub.s32 %s17, 2
      // Predicated region
      $region73: #{tpu_custom_call.1} parent=71 // pred_check
        %p958 = pneg %p292
      $region74: #{tpu_custom_call.1} parent=71 // pred_check_branch
        %960 = sbr.rel (%p958) target = $region76
      $region75: #{tpu_custom_call.1} parent=71 // pred_region
        %s961 = smul.u32 2, %s23
        %p962 = scmp.lt.s32.totalorder %s961, 5
        %s963 = scalar_select %p962, %s961, 5
        %s964 = smul.addr %s963, 8
        %s965 = scalar_lea.vmem %s11, %s964
      $region76: #{tpu_custom_call.1} parent=71 // pred_fallthru
        _
    $region72: #{tpu_custom_call.1} parent=5 // pred_fallthru
      _
  $region6: #{tpu_custom_call.1} parent=0 // loop_footer
    %s21 = sadd.s32 1, %s17
  $region7: #{tpu_custom_call.1} parent=0 // loop_footer_branch
    %16 = sbr.rel target = $region3
  $region8: #{tpu_custom_call.1} parent=0 // loop_exit
    _

</llo_original>
